<compile_context>
chip_gen: v7x
topology: tpu7x:2x2x1
jax: 0.10.0
libtpu: 0.0.40
codegen_flags: <defaults>
</compile_context>

<pallas_src>
import functools

import jax
import jax.numpy as jnp
from jax import lax
from jax.experimental import pallas as pl
from jax.experimental.pallas import tpu as pltpu


_CONTRACT_DIM0 = (((0,), (0,)), ((), ()))   # contract axis 0 of both operands
_MATMUL_DIMS = (((1,), (0,)), ((), ()))     # ordinary matmul (lhs ax1 x rhs ax0)


# ---------------------------------------------------------------------------
# Pre-pass: 1x1 convolutions == channel-contracting matmuls, emitted as bf16.
# ---------------------------------------------------------------------------
def _proj_kernel(x_ref,                 # (1, C, tp) f32
                 wb_ref, bb_ref,        # (C, C8) bf16, (C8, 1) f32
                 wc_ref, bc_ref,        # (C, C8) bf16, (C8, 1) f32
                 wd_ref,                # (C, C)  bf16   (bias deferred)
                 fb_ref, fc_ref, fd_ref):
    bf16 = jnp.bfloat16
    x = x_ref[0].astype(bf16)                                       # (C, tp)
    fb = lax.dot_general(wb_ref[...], x, _CONTRACT_DIM0,
                         preferred_element_type=jnp.float32) + bb_ref[...]
    fc = lax.dot_general(wc_ref[...], x, _CONTRACT_DIM0,
                         preferred_element_type=jnp.float32) + bc_ref[...]
    # conv_d bias is added once at the attention finalize (softmax sums to 1).
    fd = lax.dot_general(wd_ref[...], x, _CONTRACT_DIM0,
                         preferred_element_type=jnp.float32)
    fb_ref[0] = fb.astype(bf16)
    fc_ref[0] = fc.astype(bf16)
    fd_ref[0] = fd.astype(bf16)


# ---------------------------------------------------------------------------
# Main pass: flash/online-softmax position attention over the pixel axis.
# ---------------------------------------------------------------------------
def _pam_kernel(alpha_ref, nvalid_ref,  # SMEM scalars
                xq_ref,                 # (1, C,  tq) f32   residual
                fb_ref,                 # (1, C8, tq) bf16  query features
                fc_ref,                 # (1, C8, tk) bf16  key features
                fd_ref,                 # (1, C,  tk) bf16  value features
                bd_ref,                 # (C, 1)  f32       conv_d bias
                o_ref,                  # (1, C,  tq) f32
                m_scr, l_scr,           # (1, tq) f32 online-softmax stats
                acc_scr,                # (C, tq) f32 output accumulator
                *, masked):
    ki = pl.program_id(2)

    @pl.when(ki == 0)
    def _init():
        m_scr[...] = jnp.full_like(m_scr, -jnp.inf)
        l_scr[...] = jnp.zeros_like(l_scr)
        acc_scr[...] = jnp.zeros_like(acc_scr)

    fb = fb_ref[0]                     # (C8, tq)
    fc = fc_ref[0]                     # (C8, tk)
    fd = fd_ref[0]                     # (C,  tk)

    # energy^T[j, i] = <fc[:, j], fb[:, i]>  -> (tk, tq), f32 MXU accumulation.
    energy = lax.dot_general(fc, fb, _CONTRACT_DIM0,
                             preferred_element_type=jnp.float32)

    if masked:                          # static flag; emitted only if HW padded
        tk = energy.shape[0]
        key_idx = ki * tk + lax.broadcasted_iota(jnp.int32, energy.shape, 0)
        energy = jnp.where(key_idx < nvalid_ref[0], energy, -jnp.inf)

    # Online (flash) softmax over the key axis (axis 0); stats stay f32.
    m_prev = m_scr[...]                                              # (1, tq)
    m_new = jnp.maximum(m_prev, jnp.max(energy, axis=0, keepdims=True))
    corr = jnp.exp(m_prev - m_new)
    p = jnp.exp(energy - m_new)                                      # (tk, tq)
    l_scr[...] = corr * l_scr[...] + jnp.sum(p, axis=0, keepdims=True)
    acc_scr[...] = corr * acc_scr[...] + lax.dot_general(
        fd, p.astype(jnp.bfloat16), _MATMUL_DIMS,
        preferred_element_type=jnp.float32)
    m_scr[...] = m_new

    @pl.when(ki == pl.num_programs(2) - 1)
    def _finalize():
        inv_l = pl.reciprocal(l_scr[...], approx=True)               # EUP vrcp
        feat_e = acc_scr[...] * inv_l + bd_ref[...]                  # bd once
        o_ref[0] = (alpha_ref[0] * feat_e + xq_ref[0]).astype(o_ref.dtype)


# ---------------------------------------------------------------------------
# Wrapper.
# ---------------------------------------------------------------------------
def _round_up(x, m):
    return ((x + m - 1) // m) * m


def _pick_tile(hw_pad, desired):
    """Largest multiple of 128 <= desired that divides hw_pad (hw_pad % 128 == 0)."""
    desired = max(128, (desired // 128) * 128)
    t = min(desired, hw_pad)
    while hw_pad % t != 0:
        t -= 128
    return t


def _vmem_limit_bytes():
    """~3/4 of physical VMEM: ≈96 MiB on v5e/v6e (128 MiB), ≈48 MiB on v7x (64 MiB)."""
    try:
        cap = int(pltpu.get_tpu_info().vmem_capacity_bytes)
    except Exception:
        cap = 64 * 1024 * 1024          # v7x per-TC: most conservative fallback
    return min(cap * 3 // 4, 100 * 1024 * 1024)


def position_attention_module(x_nchw, params, *, tq=1024, tk=1024, tp=1024):
    """x_nchw: (B, C, H, W) float32.  Returns (B, C, H, W) float32."""
    B, C, H, W = x_nchw.shape
    assert C % 8 == 0, "in_channels must be divisible by 8 (conv_b/conv_c width)"
    C8 = C // 8
    HW = H * W
    HW_pad = _round_up(HW, 128)
    pad = HW_pad - HW

    # NCHW -> (B, C, HW): contiguous reshape only; pad pixel axis if needed.
    x = x_nchw.reshape(B, C, HW).astype(jnp.float32)
    if pad:
        x = jnp.pad(x, ((0, 0), (0, 0), (0, pad)))

    tq = _pick_tile(HW_pad, tq)
    tk = _pick_tile(HW_pad, tk)
    tp = _pick_tile(HW_pad, tp)
    n_q, n_k = HW_pad // tq, HW_pad // tk

    # v7x megacore: keep the parallel grid extent B * n_q >= 2 when possible.
    if B * n_q < 2 and HW_pad >= 256:
        tq = _pick_tile(HW_pad, HW_pad // 2)
        n_q = HW_pad // tq

    bf16 = jnp.bfloat16
    wb = params["wb"].astype(bf16)
    wc = params["wc"].astype(bf16)
    wd = params["wd"].astype(bf16)
    bb = params["bb"].reshape(C8, 1).astype(jnp.float32)
    bc = params["bc"].reshape(C8, 1).astype(jnp.float32)
    bd = params["bd"].reshape(C, 1).astype(jnp.float32)
    alpha = params["alpha"].reshape(1).astype(jnp.float32)
    n_valid = jnp.array([HW], jnp.int32)

    vmem_limit = _vmem_limit_bytes()

    # ---- pre-pass: project x once per batch element into bf16 feats ----
    proj_cost = pl.CostEstimate(
        flops=B * HW_pad * (4 * C * C8 + 2 * C * C),
        transcendentals=0,
        bytes_accessed=4 * B * C * HW_pad + 2 * B * (2 * C8 + C) * HW_pad
                       + 2 * (2 * C * C8 + C * C) + 8 * C8,
    )
    fb, fc, fd = pl.pallas_call(
        _proj_kernel,
        out_shape=(jax.ShapeDtypeStruct((B, C8, HW_pad), bf16),
                   jax.ShapeDtypeStruct((B, C8, HW_pad), bf16),
                   jax.ShapeDtypeStruct((B, C, HW_pad), bf16)),
        grid=(B, HW_pad // tp),
        in_specs=[
            pl.BlockSpec((1, C, tp), lambda b, p: (b, 0, p)),        # x tile
            pl.BlockSpec((C, C8), lambda b, p: (0, 0)),              # wb
            pl.BlockSpec((C8, 1), lambda b, p: (0, 0)),              # bb
            pl.BlockSpec((C, C8), lambda b, p: (0, 0)),              # wc
            pl.BlockSpec((C8, 1), lambda b, p: (0, 0)),              # bc
            pl.BlockSpec((C, C), lambda b, p: (0, 0)),               # wd
        ],
        out_specs=(
            pl.BlockSpec((1, C8, tp), lambda b, p: (b, 0, p)),
            pl.BlockSpec((1, C8, tp), lambda b, p: (b, 0, p)),
            pl.BlockSpec((1, C, tp), lambda b, p: (b, 0, p)),
        ),
        compiler_params=pltpu.CompilerParams(
            dimension_semantics=("parallel", "parallel"),
            vmem_limit_bytes=vmem_limit),
        cost_estimate=proj_cost,
    )(x, wb, bb, wc, bc, wd)

    # ---- main pass: flash attention over pixels, no (HW, HW) materialization ----
    main_cost = pl.CostEstimate(
        flops=B * 2 * (C8 + C) * HW_pad * HW_pad,
        transcendentals=B * HW_pad * HW_pad,
        bytes_accessed=8 * B * C * HW_pad                    # x read + out write (f32)
                       + 2 * B * C8 * HW_pad                 # fb (bf16, once)
                       + 2 * B * n_q * (C8 + C) * HW_pad     # fc/fd streamed n_q times
                       + 4 * C,
    )
    kernel = functools.partial(_pam_kernel, masked=(pad > 0))
    out = pl.pallas_call(
        kernel,
        out_shape=jax.ShapeDtypeStruct((B, C, HW_pad), jnp.float32),
        grid=(B, n_q, n_k),
        in_specs=[
            pl.BlockSpec(memory_space=pltpu.SMEM),                        # alpha
            pl.BlockSpec(memory_space=pltpu.SMEM),                        # n_valid
            pl.BlockSpec((1, C, tq), lambda b, qi, ki: (b, 0, qi)),       # x (residual)
            pl.BlockSpec((1, C8, tq), lambda b, qi, ki: (b, 0, qi)),      # feat_b
            pl.BlockSpec((1, C8, tk), lambda b, qi, ki: (b, 0, ki)),      # feat_c
            pl.BlockSpec((1, C, tk), lambda b, qi, ki: (b, 0, ki)),       # feat_d
            pl.BlockSpec((C, 1), lambda b, qi, ki: (0, 0)),               # bd
        ],
        out_specs=pl.BlockSpec((1, C, tq), lambda b, qi, ki: (b, 0, qi)),
        scratch_shapes=[
            pltpu.VMEM((1, tq), jnp.float32),     # running max
            pltpu.VMEM((1, tq), jnp.float32),     # running sum
            pltpu.VMEM((C, tq), jnp.float32),     # output accumulator
        ],
        compiler_params=pltpu.CompilerParams(
            dimension_semantics=("parallel", "parallel", "arbitrary"),
            vmem_limit_bytes=vmem_limit),
        cost_estimate=main_cost,
    )(alpha, n_valid, x, fb, fc, fd, bd)

    if pad:
        out = out[:, :, :HW]
    return out.reshape(B, C, H, W)

# TODO(synk): for tiny shapes (HW, C << 128) several batch elements could be
# merged per grid step to amortize the ~0.35us per-step overhead; not done here.


# ---------------------------------------------------------------------------
# Pure-JAX reference (mirrors the PyTorch forward exactly) and test harness.
# ---------------------------------------------------------------------------
def _reference(x_nchw, params):
    B, C, H, W = x_nchw.shape
    HW = H * W

    def conv1x1(w, b):
        return jnp.einsum("bchw,co->bohw", x_nchw, w) + b.reshape(1, -1, 1, 1)

    fb = conv1x1(params["wb"], params["bb"]).reshape(B, -1, HW).transpose(0, 2, 1)
    fc = conv1x1(params["wc"], params["bc"]).reshape(B, -1, HW)
    attn = jax.nn.softmax(jnp.einsum("bij,bjk->bik", fb, fc), axis=-1)
    fd = conv1x1(params["wd"], params["bd"]).reshape(B, -1, HW)
    fe = jnp.einsum("bcj,bij->bci", fd, attn).reshape(B, C, H, W)
    return params["alpha"].reshape(()) * fe + x_nchw


def init_params(key, C):
    C8 = C // 8
    ks = jax.random.split(key, 6)
    scale = 0.1
    return {
        "wb": scale * jax.random.normal(ks[0], (C, C8), jnp.float32),
        "bb": scale * jax.random.normal(ks[1], (C8,), jnp.float32),
        "wc": scale * jax.random.normal(ks[2], (C, C8), jnp.float32),
        "bc": scale * jax.random.normal(ks[3], (C8,), jnp.float32),
        "wd": scale * jax.random.normal(ks[4], (C, C), jnp.float32),
        "bd": scale * jax.random.normal(ks[5], (C,), jnp.float32),
        # PyTorch inits alpha=0 (output == x); nonzero so the attention path
        # is actually exercised by this synthetic test.
        "alpha": jnp.array([0.5], jnp.float32),
    }


if __name__ == "__main__":
    key = jax.random.PRNGKey(0)
    kx1, kx2, kp = jax.random.split(key, 3)
    B, C = 2, 32
    params = init_params(kp, C)

    # Case 1: HW = 256 (multiple of 128); small tiles exercise the 2x2
    # flash-tiled online-softmax accumulation path.
    x1 = jax.random.normal(kx1, (B, C, 16, 16), jnp.float32)
    out1 = jax.block_until_ready(position_attention_module(x1, params, tq=128, tk=128))
    ref1 = _reference(x1, params)
    assert out1.shape == x1.shape
    assert jnp.allclose(out1, ref1, atol=5e-2, rtol=5e-2), \
        float(jnp.max(jnp.abs(out1 - ref1)))

    # Case 2: HW = 100 (not a multiple of 128) -> pad-to-128 + key masking path.
    x2 = jax.random.normal(kx2, (B, C, 10, 10), jnp.float32)
    out2 = jax.block_until_ready(position_attention_module(x2, params))
    ref2 = _reference(x2, params)
    assert out2.shape == x2.shape
    assert jnp.allclose(out2, ref2, atol=5e-2, rtol=5e-2), \
        float(jnp.max(jnp.abs(out2 - ref2)))

    print("KERNEL_OK")
</pallas_src>

<mosaic_0001>
module attributes {stable_mosaic.version = 11 : i64} {
  func.func @_proj_kernel(%arg0: i32, %arg1: i32, %arg2: memref<1x32x256xf32, #tpu.memory_space<vmem>>, %arg3: memref<32x4xbf16, #tpu.memory_space<vmem>>, %arg4: memref<4x1xf32, #tpu.memory_space<vmem>>, %arg5: memref<32x4xbf16, #tpu.memory_space<vmem>>, %arg6: memref<4x1xf32, #tpu.memory_space<vmem>>, %arg7: memref<32x32xbf16, #tpu.memory_space<vmem>>, %arg8: memref<1x4x256xbf16, #tpu.memory_space<vmem>>, %arg9: memref<1x4x256xbf16, #tpu.memory_space<vmem>>, %arg10: memref<1x32x256xbf16, #tpu.memory_space<vmem>>) attributes {dimension_semantics = [#tpu.dimension_semantics<parallel>, #tpu.dimension_semantics<parallel>], iteration_bounds = array<i64: 2, 1>, scalar_prefetch = 0 : i64, scratch_operands = 0 : i64, tpu.core_type = #tpu.core_type<tc>, window_params = [{transform_indices = @transform_0, window_bounds = array<i64: 1, 32, 256>}, {pipeline_mode = #tpu.pipeline_mode<synchronous>, transform_indices = @transform_1, window_bounds = array<i64: 32, 4>}, {pipeline_mode = #tpu.pipeline_mode<synchronous>, transform_indices = @transform_2, window_bounds = array<i64: 4, 1>}, {pipeline_mode = #tpu.pipeline_mode<synchronous>, transform_indices = @transform_3, window_bounds = array<i64: 32, 4>}, {pipeline_mode = #tpu.pipeline_mode<synchronous>, transform_indices = @transform_4, window_bounds = array<i64: 4, 1>}, {pipeline_mode = #tpu.pipeline_mode<synchronous>, transform_indices = @transform_5, window_bounds = array<i64: 32, 32>}, {transform_indices = @transform_6, window_bounds = array<i64: 1, 4, 256>}, {transform_indices = @transform_7, window_bounds = array<i64: 1, 4, 256>}, {transform_indices = @transform_8, window_bounds = array<i64: 1, 32, 256>}]} {
    %c0 = arith.constant 0 : index
    %c0_0 = arith.constant 0 : index
    %c0_1 = arith.constant 0 : index
    %0 = vector.load %arg2[%c0, %c0_0, %c0_1] : memref<1x32x256xf32, #tpu.memory_space<vmem>>, vector<1x32x256xf32>
    %1 = vector.shape_cast %0 : vector<1x32x256xf32> to vector<32x256xf32>
    %2 = arith.truncf %1 : vector<32x256xf32> to vector<32x256xbf16>
    %c0_2 = arith.constant 0 : index
    %c0_3 = arith.constant 0 : index
    %3 = vector.load %arg3[%c0_2, %c0_3] : memref<32x4xbf16, #tpu.memory_space<vmem>>, vector<32x4xbf16>
    %cst = arith.constant dense<0.000000e+00> : vector<4x256xf32>
    %4 = tpu.matmul %3, %2, %cst {dimension_numbers = #tpu.dot_dimension_numbers<[0], [0], [1], [1], [0, 1, 1, 1], [], []>} : vector<32x4xbf16>, vector<32x256xbf16>, vector<4x256xf32> -> vector<4x256xf32>
    %c0_4 = arith.constant 0 : index
    %c0_5 = arith.constant 0 : index
    %5 = vector.load %arg4[%c0_4, %c0_5] : memref<4x1xf32, #tpu.memory_space<vmem>>, vector<4x1xf32>
    %6 = vector.broadcast %5 : vector<4x1xf32> to vector<4x256xf32>
    %7 = arith.addf %4, %6 : vector<4x256xf32>
    %c0_6 = arith.constant 0 : index
    %c0_7 = arith.constant 0 : index
    %8 = vector.load %arg5[%c0_6, %c0_7] : memref<32x4xbf16, #tpu.memory_space<vmem>>, vector<32x4xbf16>
    %cst_8 = arith.constant dense<0.000000e+00> : vector<4x256xf32>
    %9 = tpu.matmul %8, %2, %cst_8 {dimension_numbers = #tpu.dot_dimension_numbers<[0], [0], [1], [1], [0, 1, 1, 1], [], []>} : vector<32x4xbf16>, vector<32x256xbf16>, vector<4x256xf32> -> vector<4x256xf32>
    %c0_9 = arith.constant 0 : index
    %c0_10 = arith.constant 0 : index
    %10 = vector.load %arg6[%c0_9, %c0_10] : memref<4x1xf32, #tpu.memory_space<vmem>>, vector<4x1xf32>
    %11 = vector.broadcast %10 : vector<4x1xf32> to vector<4x256xf32>
    %12 = arith.addf %9, %11 : vector<4x256xf32>
    %c0_11 = arith.constant 0 : index
    %c0_12 = arith.constant 0 : index
    %13 = vector.load %arg7[%c0_11, %c0_12] : memref<32x32xbf16, #tpu.memory_space<vmem>>, vector<32x32xbf16>
    %cst_13 = arith.constant dense<0.000000e+00> : vector<32x256xf32>
    %14 = tpu.matmul %13, %2, %cst_13 {dimension_numbers = #tpu.dot_dimension_numbers<[0], [0], [1], [1], [0, 1, 1, 1], [], []>} : vector<32x32xbf16>, vector<32x256xbf16>, vector<32x256xf32> -> vector<32x256xf32>
    %15 = arith.truncf %7 : vector<4x256xf32> to vector<4x256xbf16>
    %c0_14 = arith.constant 0 : index
    %c0_15 = arith.constant 0 : index
    %c0_16 = arith.constant 0 : index
    %16 = vector.load %arg8[%c0_14, %c0_15, %c0_16] : memref<1x4x256xbf16, #tpu.memory_space<vmem>>, vector<1x4x256xbf16>
    %17 = vector.shape_cast %16 : vector<1x4x256xbf16> to vector<4x256xbf16>
    %18 = vector.shape_cast %15 : vector<4x256xbf16> to vector<1x4x256xbf16>
    tpu.vector_store %arg8[%c0_14, %c0_15, %c0_16], %18 {strides = array<i32>} : memref<1x4x256xbf16, #tpu.memory_space<vmem>>, vector<1x4x256xbf16>,
    %19 = arith.truncf %12 : vector<4x256xf32> to vector<4x256xbf16>
    %c0_17 = arith.constant 0 : index
    %c0_18 = arith.constant 0 : index
    %c0_19 = arith.constant 0 : index
    %20 = vector.load %arg9[%c0_17, %c0_18, %c0_19] : memref<1x4x256xbf16, #tpu.memory_space<vmem>>, vector<1x4x256xbf16>
    %21 = vector.shape_cast %20 : vector<1x4x256xbf16> to vector<4x256xbf16>
    %22 = vector.shape_cast %19 : vector<4x256xbf16> to vector<1x4x256xbf16>
    tpu.vector_store %arg9[%c0_17, %c0_18, %c0_19], %22 {strides = array<i32>} : memref<1x4x256xbf16, #tpu.memory_space<vmem>>, vector<1x4x256xbf16>,
    %23 = arith.truncf %14 : vector<32x256xf32> to vector<32x256xbf16>
    %c0_20 = arith.constant 0 : index
    %c0_21 = arith.constant 0 : index
    %c0_22 = arith.constant 0 : index
    %24 = vector.load %arg10[%c0_20, %c0_21, %c0_22] : memref<1x32x256xbf16, #tpu.memory_space<vmem>>, vector<1x32x256xbf16>
    %25 = vector.shape_cast %24 : vector<1x32x256xbf16> to vector<32x256xbf16>
    %26 = vector.shape_cast %23 : vector<32x256xbf16> to vector<1x32x256xbf16>
    tpu.vector_store %arg10[%c0_20, %c0_21, %c0_22], %26 {strides = array<i32>} : memref<1x32x256xbf16, #tpu.memory_space<vmem>>, vector<1x32x256xbf16>,
    return
  }
  func.func @transform_0(%arg0: i32, %arg1: i32) -> (i32, i32, i32) {
    %c0_i32 = arith.constant 0 : i32
    %c0_i32_0 = arith.constant 0 : i32
    return %arg0, %c0_i32, %arg1 : i32, i32, i32
  }
  func.func @transform_1(%arg0: i32, %arg1: i32) -> (i32, i32) {
    %c0_i32 = arith.constant 0 : i32
    %c0_i32_0 = arith.constant 0 : i32
    %c0_i32_1 = arith.constant 0 : i32
    return %c0_i32, %c0_i32_0 : i32, i32
  }
  func.func @transform_2(%arg0: i32, %arg1: i32) -> (i32, i32) {
    %c0_i32 = arith.constant 0 : i32
    %c0_i32_0 = arith.constant 0 : i32
    %c0_i32_1 = arith.constant 0 : i32
    return %c0_i32, %c0_i32_0 : i32, i32
  }
  func.func @transform_3(%arg0: i32, %arg1: i32) -> (i32, i32) {
    %c0_i32 = arith.constant 0 : i32
    %c0_i32_0 = arith.constant 0 : i32
    %c0_i32_1 = arith.constant 0 : i32
    return %c0_i32, %c0_i32_0 : i32, i32
  }
  func.func @transform_4(%arg0: i32, %arg1: i32) -> (i32, i32) {
    %c0_i32 = arith.constant 0 : i32
    %c0_i32_0 = arith.constant 0 : i32
    %c0_i32_1 = arith.constant 0 : i32
    return %c0_i32, %c0_i32_0 : i32, i32
  }
  func.func @transform_5(%arg0: i32, %arg1: i32) -> (i32, i32) {
    %c0_i32 = arith.constant 0 : i32
    %c0_i32_0 = arith.constant 0 : i32
    %c0_i32_1 = arith.constant 0 : i32
    return %c0_i32, %c0_i32_0 : i32, i32
  }
  func.func @transform_6(%arg0: i32, %arg1: i32) -> (i32, i32, i32) {
    %c0_i32 = arith.constant 0 : i32
    %c0_i32_0 = arith.constant 0 : i32
    return %arg0, %c0_i32, %arg1 : i32, i32, i32
  }
  func.func @transform_7(%arg0: i32, %arg1: i32) -> (i32, i32, i32) {
    %c0_i32 = arith.constant 0 : i32
    %c0_i32_0 = arith.constant 0 : i32
    return %arg0, %c0_i32, %arg1 : i32, i32, i32
  }
  func.func @transform_8(%arg0: i32, %arg1: i32) -> (i32, i32, i32) {
    %c0_i32 = arith.constant 0 : i32
    %c0_i32_0 = arith.constant 0 : i32
    return %arg0, %c0_i32, %arg1 : i32, i32, i32
  }
}

</mosaic_0001>

<llo_original>
// kernel: tpu_custom_call.1
$region0: #{tpu_custom_call.1}
  #allocation0 [shape = 'u32[]', space=smem, size = 0x4, offset = 0x4, fixed_abs, tag = 'smem constant byte address 0x4 - core index']
  #allocation1 [shape = 'u32[144,128]{1,0:T(1,128)}', space=vmem, size = 0x12000, scoped, tag = 'internal scratch']
  %s0 = inlined_call_operand.hbm [shape: f32[2,32,256], index: 0, kind: input, shape index: {}]
  %s1 = inlined_call_operand.vmem [shape: bf16[32,4], index: 1, kind: input, shape index: {}]
  %s2 = inlined_call_operand.vmem [shape: f32[4,1], index: 2, kind: input, shape index: {}]
  %s3 = inlined_call_operand.vmem [shape: bf16[32,4], index: 3, kind: input, shape index: {}]
  %s4 = inlined_call_operand.vmem [shape: f32[4,1], index: 4, kind: input, shape index: {}]
  %s5 = inlined_call_operand.vmem [shape: bf16[32,32], index: 5, kind: input, shape index: {}]
  %s6 = inlined_call_operand.hbm [shape: bf16[2,4,256], index: 6, kind: output, shape index: {0}]
  %s7 = inlined_call_operand.hbm [shape: bf16[2,4,256], index: 7, kind: output, shape index: {1}]
  %s8 = inlined_call_operand.hbm [shape: bf16[2,32,256], index: 8, kind: output, shape index: {2}]
  %9 = xla_tuple %s6, %s7, %s8
  %s10 = sld [smem:[#allocation0]]
  $region77: #{tpu_custom_call.1} parent=0
    _
  %s12 = ssub.s32 1, %s10
  %s13 = scalar_select 0, %s12, %s10
  $region1: #{tpu_custom_call.1} parent=0
    #allocation2 [shape = 'u8[65536]{0}', space=vmem, size = 0x10000, scoped, tag = 'input window, operand 0']
    #allocation3 [shape = 's32[2]{0}', space=sflag, size = 0x8, scoped, tag = 'scoped memory for tpu_custom_call.1']
    #allocation4 [shape = 's32[2]{0}', space=sflag, size = 0x8, scoped, tag = 'scoped memory for tpu_custom_call.1']
    #allocation5 [shape = 'u8[4096]{0}', space=vmem, size = 0x1000, scoped, tag = 'output window, operand 0']
    #allocation6 [shape = 'u8[4096]{0}', space=vmem, size = 0x1000, scoped, tag = 'output window, operand 1']
    #allocation7 [shape = 's32[2]{0}', space=sflag, size = 0x8, scoped, tag = 'scoped memory for tpu_custom_call.1']
    #allocation8 [shape = 'u8[32768]{0}', space=vmem, size = 0x8000, scoped, tag = 'output window, operand 2']
    %14 = vsyncpa [#allocation3], 0
    %s15 = scalar_lea.sflag [#allocation3], 1
    %16 = vsyncpa %s15, 0
    %17 = vsyncpa [#allocation4], 0
    %s18 = scalar_lea.sflag [#allocation4], 1
    %19 = vsyncpa %s18, 0
    %20 = vsyncpa [#allocation7], 0
    %s21 = scalar_lea.sflag [#allocation7], 1
    %22 = vsyncpa %s21, 0
    loop: start=0, step=1, limit=4
    $region2: #{tpu_custom_call.1} parent=1 // loop_pre_header
      _
    $region3: #{tpu_custom_call.1} parent=1 // loop_header
      %s24 = sphi 0, %s28
      %p25 = scmp.ge.s32.totalorder %s24, 4
      %s31 = sphi 0, %s43
      %s32 = sphi 0, %s39
      %s33 = sphi 0, %s31
      %s34 = sphi 0, %s32
      %s35 = sphi 0, %s33
      %s36 = sphi 0, %s34
      %s48 = sphi 0, %s50
      %s51 = sphi 0, %s48
      %s52 = sphi 0, %s51
      %s68 = sphi 0, %s52
      %s72 = sphi 0, %s72
      %s74 = sphi 0, %s72
      %s75 = sphi 0, %s74
      %s89 = sphi 0, %s75
      %s93 = sphi 0, %s93
      %s95 = sphi 0, %s93
      %s96 = sphi 0, %s95
      %s110 = sphi 0, %s96
      %s114 = sphi 0, %s114
      %s116 = sphi 0, %s114
      %s117 = sphi 0, %s116
      %s131 = sphi 0, %s117
      %s135 = sphi 0, %s135
      %s137 = sphi 0, %s135
      %s138 = sphi 0, %s137
      %s152 = sphi 0, %s138
      %s156 = sphi 0, %s156
      %s158 = sphi 0, %s156
      %s159 = sphi 0, %s158
      %s173 = sphi 0, %s159
      %s181 = sphi 0, %s183
      %s184 = sphi 0, %s181
      %s185 = sphi 0, %s184
      %s201 = sphi 0, %s185
      %s209 = sphi 0, %s211
      %s212 = sphi 0, %s209
      %s213 = sphi 0, %s212
      %s229 = sphi 0, %s213
      %s237 = sphi 0, %s239
      %s240 = sphi 0, %s237
      %s241 = sphi 0, %s240
      %s257 = sphi 0, %s241
    $region4: #{tpu_custom_call.1} parent=1 // loop_header_branch
      %27 = sbr.rel (%p25) target = $region8
    $region5: #{tpu_custom_call.1} parent=1 // loop_body
      %s29 = ssub.s32 %s24, 1
      %s30 = ssub.s32 %s24, 2
      %s37 = sadd.s32 1, %s32
      %p38 = scmp.ge.s32.totalorder %s37, 1
      %s39 = scalar_select %p38, 0, %s37
      %s40 = sadd.s32 1, %s31
      %s41 = scalar_select %p38, %s40, %s31
      %p42 = scmp.ge.s32.totalorder %s41, 2
      %s43 = scalar_select %p42, 0, %s41
      %s44 = ssub.s32 %s31, %s43
      %s45 = ssub.s32 %s32, %s39
      %s46 = sor.u32 %s44, %s45
      %p47 = scmp.eq.s32.totalorder %s46, 0
      %s49 = sadd.s32 %s48, 1
      %s50 = scalar_select %p47, %s48, %s49
      %p53 = pneg %p47
      %p54 = scmp.eq.s32.totalorder %s24, 1
      %p55 = por %p53, %p54
      %p56 = scmp.ne.s32.totalorder %s48, %s51
      %p57 = scmp.eq.s32.totalorder %s24, 0
      %p58 = por %p56, %p57
      %p59 = scmp.ne.s32.totalorder %s48, %s51
      %p60 = scmp.eq.s32.totalorder %s29, 1
      %p61 = por %p59, %p60
      %p62 = scmp.ne.s32.totalorder %s51, %s52
      %p63 = scmp.eq.s32.totalorder %s29, 0
      %p64 = por %p62, %p63
      %p65 = scmp.ne.s32.totalorder %s51, %s52
      %p66 = scmp.eq.s32.totalorder %s30, 1
      %p67 = por %p65, %p66
      %p69 = scmp.ne.s32.totalorder %s52, %s68
      %p70 = scmp.eq.s32.totalorder %s30, 0
      %p71 = por %p69, %p70
      %s73 = sadd.s32 %s72, 1
      %p76 = scmp.eq.s32.totalorder %s24, 1
      %p77 = scmp.ne.s32.totalorder %s72, %s74
      %p78 = scmp.eq.s32.totalorder %s24, 0
      %p79 = por %p77, %p78
      %p80 = scmp.ne.s32.totalorder %s72, %s74
      %p81 = scmp.eq.s32.totalorder %s29, 1
      %p82 = por %p80, %p81
      %p83 = scmp.ne.s32.totalorder %s74, %s75
      %p84 = scmp.eq.s32.totalorder %s29, 0
      %p85 = por %p83, %p84
      %p86 = scmp.ne.s32.totalorder %s74, %s75
      %p87 = scmp.eq.s32.totalorder %s30, 1
      %p88 = por %p86, %p87
      %p90 = scmp.ne.s32.totalorder %s75, %s89
      %p91 = scmp.eq.s32.totalorder %s30, 0
      %p92 = por %p90, %p91
      %s94 = sadd.s32 %s93, 1
      %p97 = scmp.eq.s32.totalorder %s24, 1
      %p98 = scmp.ne.s32.totalorder %s93, %s95
      %p99 = scmp.eq.s32.totalorder %s24, 0
      %p100 = por %p98, %p99
      %p101 = scmp.ne.s32.totalorder %s93, %s95
      %p102 = scmp.eq.s32.totalorder %s29, 1
      %p103 = por %p101, %p102
      %p104 = scmp.ne.s32.totalorder %s95, %s96
      %p105 = scmp.eq.s32.totalorder %s29, 0
      %p106 = por %p104, %p105
      %p107 = scmp.ne.s32.totalorder %s95, %s96
      %p108 = scmp.eq.s32.totalorder %s30, 1
      %p109 = por %p107, %p108
      %p111 = scmp.ne.s32.totalorder %s96, %s110
      %p112 = scmp.eq.s32.totalorder %s30, 0
      %p113 = por %p111, %p112
      %s115 = sadd.s32 %s114, 1
      %p118 = scmp.eq.s32.totalorder %s24, 1
      %p119 = scmp.ne.s32.totalorder %s114, %s116
      %p120 = scmp.eq.s32.totalorder %s24, 0
      %p121 = por %p119, %p120
      %p122 = scmp.ne.s32.totalorder %s114, %s116
      %p123 = scmp.eq.s32.totalorder %s29, 1
      %p124 = por %p122, %p123
      %p125 = scmp.ne.s32.totalorder %s116, %s117
      %p126 = scmp.eq.s32.totalorder %s29, 0
      %p127 = por %p125, %p126
      %p128 = scmp.ne.s32.totalorder %s116, %s117
      %p129 = scmp.eq.s32.totalorder %s30, 1
      %p130 = por %p128, %p129
      %p132 = scmp.ne.s32.totalorder %s117, %s131
      %p133 = scmp.eq.s32.totalorder %s30, 0
      %p134 = por %p132, %p133
      %s136 = sadd.s32 %s135, 1
      %p139 = scmp.eq.s32.totalorder %s24, 1
      %p140 = scmp.ne.s32.totalorder %s135, %s137
      %p141 = scmp.eq.s32.totalorder %s24, 0
      %p142 = por %p140, %p141
      %p143 = scmp.ne.s32.totalorder %s135, %s137
      %p144 = scmp.eq.s32.totalorder %s29, 1
      %p145 = por %p143, %p144
      %p146 = scmp.ne.s32.totalorder %s137, %s138
      %p147 = scmp.eq.s32.totalorder %s29, 0
      %p148 = por %p146, %p147
      %p149 = scmp.ne.s32.totalorder %s137, %s138
      %p150 = scmp.eq.s32.totalorder %s30, 1
      %p151 = por %p149, %p150
      %p153 = scmp.ne.s32.totalorder %s138, %s152
      %p154 = scmp.eq.s32.totalorder %s30, 0
      %p155 = por %p153, %p154
      %s157 = sadd.s32 %s156, 1
      %p160 = scmp.eq.s32.totalorder %s24, 1
      %p161 = scmp.ne.s32.totalorder %s156, %s158
      %p162 = scmp.eq.s32.totalorder %s24, 0
      %p163 = por %p161, %p162
      %p164 = scmp.ne.s32.totalorder %s156, %s158
      %p165 = scmp.eq.s32.totalorder %s29, 1
      %p166 = por %p164, %p165
      %p167 = scmp.ne.s32.totalorder %s158, %s159
      %p168 = scmp.eq.s32.totalorder %s29, 0
      %p169 = por %p167, %p168
      %p170 = scmp.ne.s32.totalorder %s158, %s159
      %p171 = scmp.eq.s32.totalorder %s30, 1
      %p172 = por %p170, %p171
      %p174 = scmp.ne.s32.totalorder %s159, %s173
      %p175 = scmp.eq.s32.totalorder %s30, 0
      %p176 = por %p174, %p175
      %s177 = ssub.s32 %s31, %s43
      %s178 = ssub.s32 %s32, %s39
      %s179 = sor.u32 %s177, %s178
      %p180 = scmp.eq.s32.totalorder %s179, 0
      %s182 = sadd.s32 %s181, 1
      %s183 = scalar_select %p180, %s181, %s182
      %p186 = pneg %p180
      %p187 = scmp.eq.s32.totalorder %s24, 1
      %p188 = por %p186, %p187
      %p189 = scmp.ne.s32.totalorder %s181, %s184
      %p190 = scmp.eq.s32.totalorder %s24, 0
      %p191 = por %p189, %p190
      %p192 = scmp.ne.s32.totalorder %s181, %s184
      %p193 = scmp.eq.s32.totalorder %s29, 1
      %p194 = por %p192, %p193
      %p195 = scmp.ne.s32.totalorder %s184, %s185
      %p196 = scmp.eq.s32.totalorder %s29, 0
      %p197 = por %p195, %p196
      %p198 = scmp.ne.s32.totalorder %s184, %s185
      %p199 = scmp.eq.s32.totalorder %s30, 1
      %p200 = por %p198, %p199
      %p202 = scmp.ne.s32.totalorder %s185, %s201
      %p203 = scmp.eq.s32.totalorder %s30, 0
      %p204 = por %p202, %p203
      %s205 = ssub.s32 %s31, %s43
      %s206 = ssub.s32 %s32, %s39
      %s207 = sor.u32 %s205, %s206
      %p208 = scmp.eq.s32.totalorder %s207, 0
      %s210 = sadd.s32 %s209, 1
      %s211 = scalar_select %p208, %s209, %s210
      %p214 = pneg %p208
      %p215 = scmp.eq.s32.totalorder %s24, 1
      %p216 = por %p214, %p215
      %p217 = scmp.ne.s32.totalorder %s209, %s212
      %p218 = scmp.eq.s32.totalorder %s24, 0
      %p219 = por %p217, %p218
      %p220 = scmp.ne.s32.totalorder %s209, %s212
      %p221 = scmp.eq.s32.totalorder %s29, 1
      %p222 = por %p220, %p221
      %p223 = scmp.ne.s32.totalorder %s212, %s213
      %p224 = scmp.eq.s32.totalorder %s29, 0
      %p225 = por %p223, %p224
      %p226 = scmp.ne.s32.totalorder %s212, %s213
      %p227 = scmp.eq.s32.totalorder %s30, 1
      %p228 = por %p226, %p227
      %p230 = scmp.ne.s32.totalorder %s213, %s229
      %p231 = scmp.eq.s32.totalorder %s30, 0
      %p232 = por %p230, %p231
      %s233 = ssub.s32 %s31, %s43
      %s234 = ssub.s32 %s32, %s39
      %s235 = sor.u32 %s233, %s234
      %p236 = scmp.eq.s32.totalorder %s235, 0
      %s238 = sadd.s32 %s237, 1
      %s239 = scalar_select %p236, %s237, %s238
      %p242 = pneg %p236
      %p243 = scmp.eq.s32.totalorder %s24, 1
      %p244 = por %p242, %p243
      %p245 = scmp.ne.s32.totalorder %s237, %s240
      %p246 = scmp.eq.s32.totalorder %s24, 0
      %p247 = por %p245, %p246
      %p248 = scmp.ne.s32.totalorder %s237, %s240
      %p249 = scmp.eq.s32.totalorder %s29, 1
      %p250 = por %p248, %p249
      %p251 = scmp.ne.s32.totalorder %s240, %s241
      %p252 = scmp.eq.s32.totalorder %s29, 0
      %p253 = por %p251, %p252
      %p254 = scmp.ne.s32.totalorder %s240, %s241
      %p255 = scmp.eq.s32.totalorder %s30, 1
      %p256 = por %p254, %p255
      %p258 = scmp.ne.s32.totalorder %s241, %s257
      %p259 = scmp.eq.s32.totalorder %s30, 0
      %p260 = por %p258, %p259
      %p261 = scmp.le.s32.totalorder 1, %s24
      %p262 = scmp.lt.s32.totalorder %s24, 3
      %p263 = pnand %p261, %p262
      %p264 = pneg %p263
      // Predicated region
      $region9: #{tpu_custom_call.1} parent=5 // pred_check
        _
      $region10: #{tpu_custom_call.1} parent=5 // pred_check_branch
        %266 = sbr.rel (%p263) target = $region12
      $region11: #{tpu_custom_call.1} parent=5 // pred_region
        %s267 = ssub.s32 %s24, 1
        // Predicated region
        $region13: #{tpu_custom_call.1} parent=11 // pred_check
          %p268 = pneg %p85
        $region14: #{tpu_custom_call.1} parent=11 // pred_check_branch
          %270 = sbr.rel (%p268) target = $region16
        $region15: #{tpu_custom_call.1} parent=11 // pred_region
          _
        $region16: #{tpu_custom_call.1} parent=11 // pred_fallthru
          _
        // Predicated region
        $region17: #{tpu_custom_call.1} parent=11 // pred_check
          %p271 = pneg %p106
        $region18: #{tpu_custom_call.1} parent=11 // pred_check_branch
          %273 = sbr.rel (%p271) target = $region20
        $region19: #{tpu_custom_call.1} parent=11 // pred_region
          _
        $region20: #{tpu_custom_call.1} parent=11 // pred_fallthru
          _
        // Predicated region
        $region21: #{tpu_custom_call.1} parent=11 // pred_check
          %p274 = pneg %p127
        $region22: #{tpu_custom_call.1} parent=11 // pred_check_branch
          %276 = sbr.rel (%p274) target = $region24
        $region23: #{tpu_custom_call.1} parent=11 // pred_region
          _
        $region24: #{tpu_custom_call.1} parent=11 // pred_fallthru
          _
        // Predicated region
        $region25: #{tpu_custom_call.1} parent=11 // pred_check
          %p277 = pneg %p148
        $region26: #{tpu_custom_call.1} parent=11 // pred_check_branch
          %279 = sbr.rel (%p277) target = $region28
        $region27: #{tpu_custom_call.1} parent=11 // pred_region
          _
        $region28: #{tpu_custom_call.1} parent=11 // pred_fallthru
          _
        // Predicated region
        $region29: #{tpu_custom_call.1} parent=11 // pred_check
          %p280 = pneg %p169
        $region30: #{tpu_custom_call.1} parent=11 // pred_check_branch
          %282 = sbr.rel (%p280) target = $region32
        $region31: #{tpu_custom_call.1} parent=11 // pred_region
          _
        $region32: #{tpu_custom_call.1} parent=11 // pred_fallthru
          _
      $region12: #{tpu_custom_call.1} parent=5 // pred_fallthru
        _
      %p283 = scmp.lt.s32.totalorder %s24, 2
      // Predicated region
      $region33: #{tpu_custom_call.1} parent=5 // pred_check
        %p284 = pneg %p283
      $region34: #{tpu_custom_call.1} parent=5 // pred_check_branch
        %286 = sbr.rel (%p284) target = $region36
      $region35: #{tpu_custom_call.1} parent=5 // pred_region
        // Predicated region
        $region37: #{tpu_custom_call.1} parent=35 // pred_check
          %p287 = pneg %p58
        $region38: #{tpu_custom_call.1} parent=35 // pred_check_branch
          %289 = sbr.rel (%p287) target = $region40
        $region39: #{tpu_custom_call.1} parent=35 // pred_region
          %s290 = sand.u32 %s48, 1
          %s291 = scalar_lea.sflag [#allocation3], %s290
          %s292 = sand.u32 %s48, 1
          %s293 = smul.addr %s292, 64
          %s294 = scalar_lea.vmem [#allocation2], %s293
          %s295 = smul.u32 2, %s32
          %s297 = ssub.s32 1024, 1024
          %298 = vsyncadd %s291, %s297
          %s299 = smul.addr %s31, 8
          %s300 = sadd.s32 %s295, %s299
          %s301 = smul.addr %s300, 128
          %s302 = scalar_lea.hbm %s0, %s301
          %s303 = sshll.u32 %s294, 4
          %s304 = int_to_ptr.vmem [resolvable:$true] %s303
          %309 = dma.hbm_to_vmem [thread:$0]  %s302, 1024, %s304, %s291, 256, 256, 16
        $region40: #{tpu_custom_call.1} parent=35 // pred_fallthru
          _
      $region36: #{tpu_custom_call.1} parent=5 // pred_fallthru
        _
      %p310 = scmp.le.s32.totalorder 1, %s24
      %p311 = scmp.lt.s32.totalorder %s24, 3
      %p312 = pnand %p310, %p311
      %p313 = pneg %p312
      // Predicated region
      $region41: #{tpu_custom_call.1} parent=5 // pred_check
        _
      $region42: #{tpu_custom_call.1} parent=5 // pred_check_branch
        %315 = sbr.rel (%p312) target = $region44
      $region43: #{tpu_custom_call.1} parent=5 // pred_region
        %s316 = ssub.s32 %s24, 1
        %s317 = sand.u32 %s51, 1
        %s318 = scalar_lea.sflag [#allocation3], %s317
        %s319 = sand.u32 %s51, 1
        %s320 = smul.addr %s319, 64
        %s321 = scalar_lea.vmem [#allocation2], %s320
        // Predicated region
        $region45: #{tpu_custom_call.1} parent=43 // pred_check
          %p322 = pneg %p64
        $region46: #{tpu_custom_call.1} parent=43 // pred_check_branch
          %324 = sbr.rel (%p322) target = $region48
        $region47: #{tpu_custom_call.1} parent=43 // pred_region
          %325 = dma.done %s318, 1024
        $region48: #{tpu_custom_call.1} parent=43 // pred_fallthru
          _
        %s326 = sand.u32 %s51, 1
        %s327 = scalar_lea.sflag [#allocation3], %s326
        %s328 = sand.u32 %s51, 1
        %s329 = smul.addr %s328, 64
        %s330 = scalar_lea.vmem [#allocation2], %s329
        %p331 = pneg %p64
        %p332 = pneg %p61
        %p333 = pneg %p85
        %p334 = pneg %p82
        %p335 = pneg %p106
        %p336 = pneg %p103
        %p337 = pneg %p127
        %p338 = pneg %p124
        %p339 = pneg %p148
        %p340 = pneg %p145
        %p341 = pneg %p169
        %p342 = pneg %p166
        %p343 = pneg %p197
        %p344 = pneg %p194
        %s345 = sand.u32 %s184, 1
        %s346 = scalar_lea.sflag [#allocation4], %s345
        %s347 = sand.u32 %s184, 1
        %s348 = smul.addr %s347, 4
        %s349 = scalar_lea.vmem [#allocation5], %s348
        %p350 = pneg %p225
        %p351 = pneg %p222
        %s352 = sand.u32 %s29, 1
        %s353 = scalar_lea.sflag [#allocation7], %s352
        %s354 = sand.u32 %s212, 1
        %s355 = smul.addr %s354, 4
        %s356 = scalar_lea.vmem [#allocation6], %s355
        %p357 = pneg %p253
        %p358 = pneg %p250
        %s359 = sand.u32 %s29, 1
        %s360 = scalar_lea.sflag [#allocation7], %s359
        %s361 = sand.u32 %s240, 1
        %s362 = smul.addr %s361, 32
        %s363 = scalar_lea.vmem [#allocation8], %s362
        %s364 = smul.u32 2, %s34
        %s365 = smul.u32 2, %s34
        %s366 = smul.u32 2, %s34
        %s367 = smul.u32 2, %s34
        %v369 = vld [vmem:[%s321] sm:$0xff]
        %v370 = vld [vmem:[%s321 + $0x8] sm:$0xff]
        %v371 = vld [vmem:[%s321 + $0x10] sm:$0xff]
        %v372 = vld [vmem:[%s321 + $0x18] sm:$0xff]
        %v373 = vld [vmem:[%s321 + $0x20] sm:$0xff]
        %v374 = vld [vmem:[%s321 + $0x28] sm:$0xff]
        %v375 = vld [vmem:[%s321 + $0x30] sm:$0xff]
        %v376 = vld [vmem:[%s321 + $0x38] sm:$0xff]
        %v377 = vpack.c.bf16 %v371, %v369
        %v378 = vpack.c.bf16 %v372, %v370
        %v379 = vpack.c.bf16 %v375, %v373
        %v380 = vpack.c.bf16 %v376, %v374
        %v381 = vld [vmem:[%s1] sm:$0xf]
        %v382 = vld [vmem:[%s1 + $0x4] sm:$0xf]
        %v383 = vld [vmem:[%s1 + $0x8] sm:$0xf]
        %v384 = vld [vmem:[%s1 + $0xc] sm:$0xf]
        %v385 = vld [vmem:[%s2] sm:$0xf]
        %387 = vset.pattern.permute.xlu0 0
        %388 = vperm.xlu0 %387, %v385
        %v389 = vpop.permute.xlu0 %388
        %v395 = vunpack.c.l.b16 %v381
        %v396 = vunpack.c.l.b16 %v382
        %v397 = vunpack.c.l.b16 %v383
        %v398 = vunpack.c.l.b16 %v384
        %v399 = vpack.c.b16 %v396, %v395
        %v400 = vpack.c.b16 %v398, %v397
        %403 = vxpose.xlu0.c.b16.start [1/8] %v399, 128
        %404 = vxpose.xlu0.c.b16.cont [2/8] %v400, 128
        %405 = vxpose.xlu0.c.b16.cont [3/8] 0, 128
        %406 = vxpose.xlu0.c.b16.cont [4/8] 0, 128
        %407 = vxpose.xlu0.c.b16.cont [5/8] 0, 128
        %408 = vxpose.xlu0.c.b16.cont [6/8] 0, 128
        %409 = vxpose.xlu0.c.b16.cont [7/8] 0, 128
        %410 = vxpose.xlu0.c.b16.end [8/8] 0, 128
        %v411 = vpop.trf.xlu0
        %v412 = vpop.trf.xlu0
        %v413 = vpop.trf.xlu0
        %v414 = vpop.trf.xlu0
        %v415 = vpop.trf.xlu0
        %v416 = vpop.trf.xlu0
        %v417 = vpop.trf.xlu0
        %v418 = vpop.trf.xlu0
        %vm419 = vcmask 261120
        %v421 = vsel %vm419, %v411, 0
        %423 = vmatprep.subr.bf16.mxu0 %v378
        %424 = vmatpush1.bf16.msra.mxu0 %v377
        %425 = vmatprep.subr.bf16.mxu0 %v380
        %426 = vmatpush1.bf16.msra.mxu0 %v379
        %427 = vmatprep.subr.bf16.mxu0 0
        %428 = vmatpush1.bf16.msra.mxu0 0
        %429 = vmatprep.subr.bf16.mxu0 0
        %430 = vmatpush1.bf16.msra.mxu0 0
        %431 = vmatprep.subr.bf16.mxu0 0
        %432 = vmatpush1.bf16.msra.mxu0 0
        %433 = vmatprep.subr.bf16.mxu0 0
        %434 = vmatpush1.bf16.msra.mxu0 0
        %435 = vmatprep.subr.bf16.mxu0 0
        %436 = vmatpush1.bf16.msra.mxu0 0
        %437 = vmatprep.subr.bf16.mxu0 0
        %438 = vmatpush1.bf16.msra.mxu0 0
        %439 = vmatprep.subr.bf16.mxu0 0
        %440 = vmatpush1.bf16.msra.mxu0 0
        %441 = vmatprep.subr.bf16.mxu0 0
        %442 = vmatpush1.bf16.msra.mxu0 0
        %443 = vmatprep.subr.bf16.mxu0 0
        %444 = vmatpush1.bf16.msra.mxu0 0
        %445 = vmatprep.subr.bf16.mxu0 0
        %446 = vmatpush1.bf16.msra.mxu0 0
        %447 = vmatprep.subr.bf16.mxu0 0
        %448 = vmatpush1.bf16.msra.mxu0 0
        %449 = vmatprep.subr.bf16.mxu0 0
        %450 = vmatpush1.bf16.msra.mxu0 0
        %451 = vmatprep.subr.bf16.mxu0 0
        %452 = vmatpush1.bf16.msra.mxu0 0
        %453 = vmatprep.subr.bf16.mxu0 0
        %454 = vmatpush1.bf16.msra.mxu0 0
        %455 = vmatprep.mubr.bf16.mxu0 0
        %456 = vmatmul.mubr.bf16.gmra.mrb[0].mxu0 %v421
        %v457 = vpop.f32.mrb[0].mxu0
        %v458 = vadd.f32 %v389, %v457
        %v459 = vpop.f32.mrb[0].mxu0
        %v460 = vadd.f32 %v389, %v459
        %v461 = vpop.f32.mrb[0].mxu0
        %v462 = vpop.f32.mrb[0].mxu0
        %463 = vdwg.mxu0
        %v464 = vld [vmem:[%s3] sm:$0xf]
        %v465 = vld [vmem:[%s3 + $0x4] sm:$0xf]
        %v466 = vld [vmem:[%s3 + $0x8] sm:$0xf]
        %v467 = vld [vmem:[%s3 + $0xc] sm:$0xf]
        %v468 = vld [vmem:[%s4] sm:$0xf]
        %470 = vset.pattern.permute.xlu0 0
        %471 = vperm.xlu0 %470, %v468
        %v472 = vpop.permute.xlu0 %471
        %v478 = vunpack.c.l.b16 %v464
        %v479 = vunpack.c.l.b16 %v465
        %v480 = vunpack.c.l.b16 %v466
        %v481 = vunpack.c.l.b16 %v467
        %v482 = vpack.c.b16 %v479, %v478
        %v483 = vpack.c.b16 %v481, %v480
        %486 = vxpose.xlu0.c.b16.start [1/8] %v482, 128
        %487 = vxpose.xlu0.c.b16.cont [2/8] %v483, 128
        %488 = vxpose.xlu0.c.b16.cont [3/8] 0, 128
        %489 = vxpose.xlu0.c.b16.cont [4/8] 0, 128
        %490 = vxpose.xlu0.c.b16.cont [5/8] 0, 128
        %491 = vxpose.xlu0.c.b16.cont [6/8] 0, 128
        %492 = vxpose.xlu0.c.b16.cont [7/8] 0, 128
        %493 = vxpose.xlu0.c.b16.end [8/8] 0, 128
        %v494 = vpop.trf.xlu0
        %v495 = vpop.trf.xlu0
        %v496 = vpop.trf.xlu0
        %v497 = vpop.trf.xlu0
        %v498 = vpop.trf.xlu0
        %v499 = vpop.trf.xlu0
        %v500 = vpop.trf.xlu0
        %v501 = vpop.trf.xlu0
        %v503 = vsel %vm419, %v494, 0
        %505 = vmatprep.subr.bf16.mxu0 %v378
        %506 = vmatpush1.bf16.msra.mxu0 %v377
        %507 = vmatprep.subr.bf16.mxu0 %v380
        %508 = vmatpush1.bf16.msra.mxu0 %v379
        %509 = vmatprep.subr.bf16.mxu0 0
        %510 = vmatpush1.bf16.msra.mxu0 0
        %511 = vmatprep.subr.bf16.mxu0 0
        %512 = vmatpush1.bf16.msra.mxu0 0
        %513 = vmatprep.subr.bf16.mxu0 0
        %514 = vmatpush1.bf16.msra.mxu0 0
        %515 = vmatprep.subr.bf16.mxu0 0
        %516 = vmatpush1.bf16.msra.mxu0 0
        %517 = vmatprep.subr.bf16.mxu0 0
        %518 = vmatpush1.bf16.msra.mxu0 0
        %519 = vmatprep.subr.bf16.mxu0 0
        %520 = vmatpush1.bf16.msra.mxu0 0
        %521 = vmatprep.subr.bf16.mxu0 0
        %522 = vmatpush1.bf16.msra.mxu0 0
        %523 = vmatprep.subr.bf16.mxu0 0
        %524 = vmatpush1.bf16.msra.mxu0 0
        %525 = vmatprep.subr.bf16.mxu0 0
        %526 = vmatpush1.bf16.msra.mxu0 0
        %527 = vmatprep.subr.bf16.mxu0 0
        %528 = vmatpush1.bf16.msra.mxu0 0
        %529 = vmatprep.subr.bf16.mxu0 0
        %530 = vmatpush1.bf16.msra.mxu0 0
        %531 = vmatprep.subr.bf16.mxu0 0
        %532 = vmatpush1.bf16.msra.mxu0 0
        %533 = vmatprep.subr.bf16.mxu0 0
        %534 = vmatpush1.bf16.msra.mxu0 0
        %535 = vmatprep.subr.bf16.mxu0 0
        %536 = vmatpush1.bf16.msra.mxu0 0
        %537 = vmatprep.mubr.bf16.mxu0 0
        %538 = vmatmul.mubr.bf16.gmra.mrb[0].mxu0 %v503
        %v539 = vpop.f32.mrb[0].mxu0
        %v540 = vadd.f32 %v472, %v539
        %v541 = vpop.f32.mrb[0].mxu0
        %v542 = vadd.f32 %v472, %v541
        %v543 = vpop.f32.mrb[0].mxu0
        %v544 = vpop.f32.mrb[0].mxu0
        %545 = vdwg.mxu0
        %v546 = vld [vmem:[%s5] sm:$0xf]
        %v547 = vld [vmem:[%s5 + $0x4] sm:$0xf]
        %v548 = vld [vmem:[%s5 + $0x8] sm:$0xf]
        %v549 = vld [vmem:[%s5 + $0xc] sm:$0xf]
        %v554 = vunpack.c.l.b16 %v546
        %v555 = vunpack.c.l.b16 %v547
        %v556 = vunpack.c.l.b16 %v548
        %v557 = vunpack.c.l.b16 %v549
        %v558 = vpack.c.b16 %v555, %v554
        %v559 = vpack.c.b16 %v557, %v556
        %562 = vxpose.xlu0.c.b16.start [1/8] %v558, 128
        %563 = vxpose.xlu0.c.b16.cont [2/8] %v559, 128
        %564 = vxpose.xlu0.c.b16.cont [3/8] 0, 128
        %565 = vxpose.xlu0.c.b16.cont [4/8] 0, 128
        %566 = vxpose.xlu0.c.b16.cont [5/8] 0, 128
        %567 = vxpose.xlu0.c.b16.cont [6/8] 0, 128
        %568 = vxpose.xlu0.c.b16.cont [7/8] 0, 128
        %569 = vxpose.xlu0.c.b16.end [8/8] 0, 128
        %v570 = vpop.trf.xlu0
        %v571 = vpop.trf.xlu0
        %v572 = vpop.trf.xlu0
        %v573 = vpop.trf.xlu0
        %v574 = vpop.trf.xlu0
        %v575 = vpop.trf.xlu0
        %v576 = vpop.trf.xlu0
        %v577 = vpop.trf.xlu0
        %v579 = vsel %vm419, %v570, 0
        %v582 = vsel %vm419, %v571, 0
        %584 = vmatprep.subr.bf16.mxu0 %v378
        %585 = vmatpush1.bf16.msra.mxu0 %v377
        %586 = vmatprep.subr.bf16.mxu0 %v380
        %587 = vmatpush1.bf16.msra.mxu0 %v379
        %588 = vmatprep.subr.bf16.mxu0 0
        %589 = vmatpush1.bf16.msra.mxu0 0
        %590 = vmatprep.subr.bf16.mxu0 0
        %591 = vmatpush1.bf16.msra.mxu0 0
        %592 = vmatprep.subr.bf16.mxu0 0
        %593 = vmatpush1.bf16.msra.mxu0 0
        %594 = vmatprep.subr.bf16.mxu0 0
        %595 = vmatpush1.bf16.msra.mxu0 0
        %596 = vmatprep.subr.bf16.mxu0 0
        %597 = vmatpush1.bf16.msra.mxu0 0
        %598 = vmatprep.subr.bf16.mxu0 0
        %599 = vmatpush1.bf16.msra.mxu0 0
        %600 = vmatprep.subr.bf16.mxu0 0
        %601 = vmatpush1.bf16.msra.mxu0 0
        %602 = vmatprep.subr.bf16.mxu0 0
        %603 = vmatpush1.bf16.msra.mxu0 0
        %604 = vmatprep.subr.bf16.mxu0 0
        %605 = vmatpush1.bf16.msra.mxu0 0
        %606 = vmatprep.subr.bf16.mxu0 0
        %607 = vmatpush1.bf16.msra.mxu0 0
        %608 = vmatprep.subr.bf16.mxu0 0
        %609 = vmatpush1.bf16.msra.mxu0 0
        %610 = vmatprep.subr.bf16.mxu0 0
        %611 = vmatpush1.bf16.msra.mxu0 0
        %612 = vmatprep.subr.bf16.mxu0 0
        %613 = vmatpush1.bf16.msra.mxu0 0
        %614 = vmatprep.subr.bf16.mxu0 0
        %615 = vmatpush1.bf16.msra.mxu0 0
        %616 = vmatprep.mubr.bf16.mxu0 0
        %617 = vmatmul.mubr.bf16.gmra.mrb[0].mxu0 %v579
        %v618 = vpop.f32.mrb[0].mxu0
        %v619 = vadd.f32 0.0, %v618
        %v620 = vpop.f32.mrb[0].mxu0
        %v621 = vadd.f32 0.0, %v620
        %v622 = vpop.f32.mrb[0].mxu0
        %v623 = vadd.f32 0.0, %v622
        %v624 = vpop.f32.mrb[0].mxu0
        %v625 = vadd.f32 0.0, %v624
        %626 = vmatprep.mubr.bf16.mxu0 0
        %627 = vmatmul.mubr.bf16.gmra.mrb[0].mxu0 %v582
        %v628 = vpop.f32.mrb[0].mxu0
        %v629 = vadd.f32 0.0, %v628
        %v630 = vpop.f32.mrb[0].mxu0
        %v631 = vadd.f32 0.0, %v630
        %v632 = vpop.f32.mrb[0].mxu0
        %v633 = vadd.f32 0.0, %v632
        %v634 = vpop.f32.mrb[0].mxu0
        %v635 = vadd.f32 0.0, %v634
        %636 = vdwg.mxu0
        %v637 = vpack.c.bf16 %v458, %v458
        %v638 = vpack.c.bf16 %v460, %v460
        %v641 = vcombine.low %v637, %v638
        %v643 = vunpack.c.l.s4 1983009808
        %v644 = vunpack.c.0.s8 %v643
        %v645 = vlaneseq
        %v646 = vshrl.u32 %v645, 7
        %v647 = vsub.s32 %v644, %v646
        %v648 = vrot.slane %v641, %v647
        %650 = vst [vmem:[%s349] sm:$0xf] %v648
        %v651 = vpack.c.bf16 %v540, %v540
        %v652 = vpack.c.bf16 %v542, %v542
        %v655 = vcombine.low %v651, %v652
        %v657 = vunpack.c.l.s4 1983009808
        %v658 = vunpack.c.0.s8 %v657
        %v659 = vlaneseq
        %v660 = vshrl.u32 %v659, 7
        %v661 = vsub.s32 %v658, %v660
        %v662 = vrot.slane %v655, %v661
        %664 = vst [vmem:[%s356] sm:$0xf] %v662
        %v665 = vpack.c.bf16 %v623, %v619
        %v666 = vpack.c.bf16 %v625, %v621
        %v667 = vpack.c.bf16 %v633, %v629
        %v668 = vpack.c.bf16 %v635, %v631
        %v673 = vunpack.c.l.b16 %v665
        %v674 = vunpack.c.l.b16 %v666
        %v675 = vunpack.c.h.b16 %v665
        %v676 = vunpack.c.h.b16 %v666
        %v677 = vunpack.c.l.b16 %v667
        %v678 = vunpack.c.l.b16 %v668
        %v679 = vunpack.c.h.b16 %v667
        %v680 = vunpack.c.h.b16 %v668
        %v681 = vpack.c.b16 %v674, %v673
        %v682 = vpack.c.b16 %v676, %v675
        %v683 = vpack.c.b16 %v678, %v677
        %v684 = vpack.c.b16 %v680, %v679
        %689 = vst [vmem:[%s363] sm:$0xff] %v681
        %690 = vst [vmem:[%s363 + $0x8] sm:$0xff] %v682
        %691 = vst [vmem:[%s363 + $0x10] sm:$0xff] %v683
        %692 = vst [vmem:[%s363 + $0x18] sm:$0xff] %v684
        %s693 = sand.u32 %s184, 1
        %s694 = scalar_lea.sflag [#allocation4], %s693
        %s695 = sand.u32 %s184, 1
        %s696 = smul.addr %s695, 4
        %s697 = scalar_lea.vmem [#allocation5], %s696
        %s698 = sand.u32 %s29, 1
        %s699 = scalar_lea.sflag [#allocation7], %s698
        %s700 = sand.u32 %s212, 1
        %s701 = smul.addr %s700, 4
        %s702 = scalar_lea.vmem [#allocation6], %s701
        %s703 = sand.u32 %s29, 1
        %s704 = scalar_lea.sflag [#allocation7], %s703
        %s705 = sand.u32 %s240, 1
        %s706 = smul.addr %s705, 32
        %s707 = scalar_lea.vmem [#allocation8], %s706
        // Predicated region
        $region49: #{tpu_custom_call.1} parent=43 // pred_check
          %p708 = pneg %p194
        $region50: #{tpu_custom_call.1} parent=43 // pred_check_branch
          %710 = sbr.rel (%p708) target = $region52
        $region51: #{tpu_custom_call.1} parent=43 // pred_region
          %s711 = smul.u32 2, %s34
          %s713 = ssub.s32 64, 64
          %714 = vsyncadd %s694, %s713
          %s715 = smul.addr %s33, 2
          %s716 = sadd.s32 %s711, %s715
          %s717 = smul.addr %s716, 32
          %s718 = scalar_lea.hbm %s6, %s717
          %s720 = sshll.u32 %s697, 4
          %s721 = int_to_ptr.vmem [resolvable:$true] %s720
          %723 = dma.vmem_to_hbm [thread:$0]  %s721, 64, %s718, %s694
        $region52: #{tpu_custom_call.1} parent=43 // pred_fallthru
          _
        // Predicated region
        $region53: #{tpu_custom_call.1} parent=43 // pred_check
          %p724 = pneg %p222
        $region54: #{tpu_custom_call.1} parent=43 // pred_check_branch
          %726 = sbr.rel (%p724) target = $region56
        $region55: #{tpu_custom_call.1} parent=43 // pred_region
          %s727 = smul.u32 2, %s34
          %s729 = ssub.s32 64, 64
          %730 = vsyncadd %s699, %s729
          %s731 = smul.addr %s33, 2
          %s732 = sadd.s32 %s727, %s731
          %s733 = smul.addr %s732, 32
          %s734 = scalar_lea.hbm %s7, %s733
          %s736 = sshll.u32 %s702, 4
          %s737 = int_to_ptr.vmem [resolvable:$true] %s736
          %739 = dma.vmem_to_hbm [thread:$0]  %s737, 64, %s734, %s699
        $region56: #{tpu_custom_call.1} parent=43 // pred_fallthru
          _
        // Predicated region
        $region57: #{tpu_custom_call.1} parent=43 // pred_check
          %p740 = pneg %p250
        $region58: #{tpu_custom_call.1} parent=43 // pred_check_branch
          %742 = sbr.rel (%p740) target = $region60
        $region59: #{tpu_custom_call.1} parent=43 // pred_region
          %s743 = smul.u32 2, %s34
          %s745 = ssub.s32 512, 512
          %746 = vsyncadd %s704, %s745
          %s747 = smul.addr %s33, 8
          %s748 = sadd.s32 %s743, %s747
          %s749 = smul.addr %s748, 64
          %s750 = scalar_lea.hbm %s8, %s749
          %s751 = sshll.u32 %s707, 4
          %s752 = int_to_ptr.vmem [resolvable:$true] %s751
          %757 = dma.vmem_to_hbm [thread:$0]  %s752, 512, %s750, %s704, 128, 128, 8
        $region60: #{tpu_custom_call.1} parent=43 // pred_fallthru
          _
      $region44: #{tpu_custom_call.1} parent=5 // pred_fallthru
        _
      %p758 = scmp.le.s32.totalorder 2, %s24
      // Predicated region
      $region61: #{tpu_custom_call.1} parent=5 // pred_check
        %p759 = pneg %p758
      $region62: #{tpu_custom_call.1} parent=5 // pred_check_branch
        %761 = sbr.rel (%p759) target = $region64
      $region63: #{tpu_custom_call.1} parent=5 // pred_region
        %s762 = ssub.s32 %s24, 2
        // Predicated region
        $region65: #{tpu_custom_call.1} parent=63 // pred_check
          %p763 = pneg %p200
        $region66: #{tpu_custom_call.1} parent=63 // pred_check_branch
          %765 = sbr.rel (%p763) target = $region68
        $region67: #{tpu_custom_call.1} parent=63 // pred_region
          %s766 = sand.u32 %s185, 1
          %s767 = scalar_lea.sflag [#allocation4], %s766
          %s768 = sand.u32 %s185, 1
          %s769 = smul.addr %s768, 4
          %s770 = scalar_lea.vmem [#allocation5], %s769
          %771 = dma.done %s767, 64
        $region68: #{tpu_custom_call.1} parent=63 // pred_fallthru
          _
        // Predicated region
        $region69: #{tpu_custom_call.1} parent=63 // pred_check
          %p772 = pneg %p228
        $region70: #{tpu_custom_call.1} parent=63 // pred_check_branch
          %774 = sbr.rel (%p772) target = $region72
        $region71: #{tpu_custom_call.1} parent=63 // pred_region
          %s775 = sand.u32 %s30, 1
          %s776 = scalar_lea.sflag [#allocation7], %s775
          %s777 = sand.u32 %s213, 1
          %s778 = smul.addr %s777, 4
          %s779 = scalar_lea.vmem [#allocation6], %s778
          %780 = dma.done %s776, 64
        $region72: #{tpu_custom_call.1} parent=63 // pred_fallthru
          _
        // Predicated region
        $region73: #{tpu_custom_call.1} parent=63 // pred_check
          %p781 = pneg %p256
        $region74: #{tpu_custom_call.1} parent=63 // pred_check_branch
          %783 = sbr.rel (%p781) target = $region76
        $region75: #{tpu_custom_call.1} parent=63 // pred_region
          %s784 = sand.u32 %s30, 1
          %s785 = scalar_lea.sflag [#allocation7], %s784
          %s786 = sand.u32 %s241, 1
          %s787 = smul.addr %s786, 32
          %s788 = scalar_lea.vmem [#allocation8], %s787
          %789 = dma.done %s785, 512
        $region76: #{tpu_custom_call.1} parent=63 // pred_fallthru
          _
      $region64: #{tpu_custom_call.1} parent=5 // pred_fallthru
        _
    $region6: #{tpu_custom_call.1} parent=1 // loop_footer
      %s28 = sadd.s32 1, %s24
    $region7: #{tpu_custom_call.1} parent=1 // loop_footer_branch
      %23 = sbr.rel target = $region3
    $region8: #{tpu_custom_call.1} parent=1 // loop_exit
      _
    %790 = vsyncpa [#allocation3], 1
    %s791 = scalar_lea.sflag [#allocation3], 1
    %792 = vsyncpa %s791, 1
    %793 = vsyncpa [#allocation4], 1
    %s794 = scalar_lea.sflag [#allocation4], 1
    %795 = vsyncpa %s794, 1
    %796 = vsyncpa [#allocation7], 1
    %s797 = scalar_lea.sflag [#allocation7], 1
    %798 = vsyncpa %s797, 1

</llo_original>
